<compile_context>
chip_gen: v6e
topology: v6e:2x2x1
jax: 0.10.0
libtpu: 0.0.40
codegen_flags: <defaults>
</compile_context>

<pallas_src>
import functools

import jax
import jax.numpy as jnp
from jax.experimental import pallas as pl
from jax.experimental.pallas import tpu as pltpu

HIDDEN = 256  # fixed by the module: nn.Linear(input_channels, 256)


def _round_up(n, m):
    return ((n + m - 1) // m) * m


def encoder_kernel(x_ref, w1_ref, b1_ref, w2_ref, b2_ref, o_ref):
    """One batch tile: Linear -> ReLU -> Linear (+bias), lane-dense store.

    x_ref  : [TM, K_pad]    (VMEM, pipelined over the batch grid, f32 or bf16)
    w1_ref : [K_pad, HIDDEN](VMEM-resident, pre-transposed & zero-padded)
    b1_ref : [1, HIDDEN]    (f32)
    w2_ref : [HIDDEN, 2*L]  (VMEM-resident, pre-transposed)
    b2_ref : [1, 2*L]       (f32)
    o_ref  : [TM, 2*L]      (single lane-dense output; chunk done in wrapper)
    """
    cdt = w1_ref.dtype                        # compute dtype (f32 or bf16)
    x = x_ref[...].astype(cdt)                # no-op when wrapper pre-casts

    # Layer 1: MXU matmul (f32 accumulate), bias + ReLU on the VPU.
    h = jnp.dot(x, w1_ref[...], preferred_element_type=jnp.float32)
    h = jnp.maximum(h + b1_ref[...], 0.0)

    # Layer 2: MXU matmul (f32 accumulate) + bias, full-width unmasked store.
    o = jnp.dot(h.astype(cdt), w2_ref[...], preferred_element_type=jnp.float32)
    o_ref[...] = (o + b2_ref[...]).astype(o_ref.dtype)


def prepare_params(w1, b1, w2, b2, *, compute_dtype=jnp.float32, pad_k_to=128):
    """One-time parameter prep (hoisted out of the per-call path).

    PyTorch Linear stores weight as (out, in); pre-transpose to (in, out) so
    the kernel computes x @ W_t. W1's input (K) dim is zero-padded to a
    multiple of `pad_k_to` (exact: padded x columns hit zero weight rows).
    Biases become [1, D]. Optionally cast weights to bf16 (half weight DMA,
    faster MXU) while keeping f32 accumulation in the kernel.
    """
    w1_t = jnp.asarray(w1, jnp.float32).T          # (C_in, HIDDEN)
    c_in = w1_t.shape[0]
    k_pad = _round_up(c_in, pad_k_to)
    if k_pad != c_in:
        w1_t = jnp.pad(w1_t, ((0, k_pad - c_in), (0, 0)))
    return (w1_t.astype(compute_dtype),
            jnp.asarray(b1, jnp.float32).reshape(1, -1),
            jnp.asarray(w2, jnp.float32).T.astype(compute_dtype),
            jnp.asarray(b2, jnp.float32).reshape(1, -1))


@functools.partial(jax.jit, static_argnames=("tm", "out_dtype"))
def encoder_forward(x, params, *, tm=256, out_dtype=jnp.float32):
    """Returns (mu, var) = torch.chunk(net(x), 2, dim=-1)."""
    w1_t, b1, w2_t, b2 = params
    B, c_in = x.shape
    k_pad, H = w1_t.shape
    two_L = w2_t.shape[1]
    L = two_L // 2

    # Cast x once here (bf16 path halves the dominant activation DMA stream).
    x = x.astype(w1_t.dtype)

    # Pad K to match the zero-padded W1 rows (exact).
    if k_pad != c_in:
        x = jnp.pad(x, ((0, 0), (0, k_pad - c_in)))

    # Pad B so we can always pick an MXU/DMA-sized batch tile.
    tm_eff = min(tm, _round_up(B, 8))
    b_pad = _round_up(B, tm_eff)
    if b_pad != B:
        x = jnp.pad(x, ((0, b_pad - B), (0, 0)))

    grid = (b_pad // tm_eff,)

    flops = 2 * b_pad * (k_pad * H + H * two_L)
    bytes_accessed = (x.size * x.dtype.itemsize
                      + w1_t.size * w1_t.dtype.itemsize
                      + w2_t.size * w2_t.dtype.itemsize
                      + (b1.size + b2.size) * 4
                      + b_pad * two_L * jnp.dtype(out_dtype).itemsize)

    o = pl.pallas_call(
        encoder_kernel,
        out_shape=jax.ShapeDtypeStruct((b_pad, two_L), out_dtype),
        grid=grid,
        in_specs=[
            pl.BlockSpec((tm_eff, k_pad), lambda i: (i, 0)),   # x: batch-tiled
            pl.BlockSpec((k_pad, H), lambda i: (0, 0)),        # W1t: VMEM-resident
            pl.BlockSpec((1, H), lambda i: (0, 0)),            # b1
            pl.BlockSpec((H, two_L), lambda i: (0, 0)),        # W2t: VMEM-resident
            pl.BlockSpec((1, two_L), lambda i: (0, 0)),        # b2
        ],
        out_specs=pl.BlockSpec((tm_eff, two_L), lambda i: (i, 0)),  # lane-dense
        compiler_params=pltpu.CompilerParams(
            dimension_semantics=("parallel",)),                # v7x megacore
        cost_estimate=pl.CostEstimate(flops=flops, transcendentals=0,
                                      bytes_accessed=bytes_accessed),
    )(x, w1_t, b1, w2_t, b2)

    o = o[:B]                       # drop batch padding
    return o[:, :L], o[:, L:]       # torch.chunk in the wrapper (cheap XLA slice)


def reference_forward(x, w1, b1, w2, b2):
    """Pure-JAX reference mirroring the PyTorch module semantics."""
    h = jnp.maximum(x @ w1.T + b1, 0.0)
    o = h @ w2.T + b2
    L = o.shape[-1] // 2
    return o[:, :L], o[:, L:]


if __name__ == "__main__":
    B, C_IN, LATENT = 16, 64, 64          # batch, input_channels, latent_dim

    key = jax.random.PRNGKey(0)
    k_x, k_w1, k_b1, k_w2, k_b2 = jax.random.split(key, 5)

    x = jax.random.normal(k_x, (B, C_IN), dtype=jnp.float32)

    # nn.Linear shapes: weight (out, in), bias (out,), uniform(-1/sqrt(in), ...).
    bnd1 = 1.0 / jnp.sqrt(jnp.float32(C_IN))
    w1 = jax.random.uniform(k_w1, (HIDDEN, C_IN), jnp.float32, -bnd1, bnd1)
    b1 = jax.random.uniform(k_b1, (HIDDEN,), jnp.float32, -bnd1, bnd1)
    bnd2 = 1.0 / jnp.sqrt(jnp.float32(HIDDEN))
    w2 = jax.random.uniform(k_w2, (2 * LATENT, HIDDEN), jnp.float32, -bnd2, bnd2)
    b2 = jax.random.uniform(k_b2, (2 * LATENT,), jnp.float32, -bnd2, bnd2)

    mu_exp, var_exp = reference_forward(x, w1, b1, w2, b2)

    # f32 path (exact vs reference).  tm=256 is clamped to the small demo batch.
    params = prepare_params(w1, b1, w2, b2)
    mu, var = jax.block_until_ready(encoder_forward(x, params))
    assert mu.shape == (B, LATENT) and var.shape == (B, LATENT)
    assert jnp.allclose(mu, mu_exp, atol=1e-4, rtol=1e-4), "mu mismatch (f32)"
    assert jnp.allclose(var, var_exp, atol=1e-4, rtol=1e-4), "var mismatch (f32)"

    # bf16 path: bf16 weights AND bf16 activation DMA, f32 accumulate, f32 out.
    params_bf16 = prepare_params(w1, b1, w2, b2, compute_dtype=jnp.bfloat16)
    mu_b, var_b = jax.block_until_ready(encoder_forward(x, params_bf16))
    assert jnp.allclose(mu_b, mu_exp, atol=1e-1, rtol=1e-1), "mu mismatch (bf16)"
    assert jnp.allclose(var_b, var_exp, atol=1e-1, rtol=1e-1), "var mismatch (bf16)"

    print("KERNEL_OK")
</pallas_src>

<mosaic_0001>
module attributes {stable_mosaic.version = 11 : i64} {
  func.func @encoder_kernel(%arg0: i32, %arg1: memref<16x128xf32, #tpu.memory_space<vmem>>, %arg2: memref<128x256xf32, #tpu.memory_space<vmem>>, %arg3: memref<1x256xf32, #tpu.memory_space<vmem>>, %arg4: memref<256x128xf32, #tpu.memory_space<vmem>>, %arg5: memref<1x128xf32, #tpu.memory_space<vmem>>, %arg6: memref<16x128xf32, #tpu.memory_space<vmem>>) attributes {dimension_semantics = [#tpu.dimension_semantics<parallel>], iteration_bounds = array<i64: 1>, scalar_prefetch = 0 : i64, scratch_operands = 0 : i64, tpu.core_type = #tpu.core_type<tc>, window_params = [{transform_indices = @transform_0, window_bounds = array<i64: 16, 128>}, {pipeline_mode = #tpu.pipeline_mode<synchronous>, transform_indices = @transform_1, window_bounds = array<i64: 128, 256>}, {pipeline_mode = #tpu.pipeline_mode<synchronous>, transform_indices = @transform_2, window_bounds = array<i64: 1, 256>}, {pipeline_mode = #tpu.pipeline_mode<synchronous>, transform_indices = @transform_3, window_bounds = array<i64: 256, 128>}, {pipeline_mode = #tpu.pipeline_mode<synchronous>, transform_indices = @transform_4, window_bounds = array<i64: 1, 128>}, {transform_indices = @transform_5, window_bounds = array<i64: 16, 128>}]} {
    %c0 = arith.constant 0 : index
    %c0_0 = arith.constant 0 : index
    %0 = vector.load %arg1[%c0, %c0_0] : memref<16x128xf32, #tpu.memory_space<vmem>>, vector<16x128xf32>
    %c0_1 = arith.constant 0 : index
    %c0_2 = arith.constant 0 : index
    %1 = vector.load %arg2[%c0_1, %c0_2] : memref<128x256xf32, #tpu.memory_space<vmem>>, vector<128x256xf32>
    %cst = arith.constant dense<0.000000e+00> : vector<16x256xf32>
    %2 = tpu.matmul %0, %1, %cst {dimension_numbers = #tpu.dot_dimension_numbers<[1], [0], [0], [1], [0, 0, 1, 1], [], []>} : vector<16x128xf32>, vector<128x256xf32>, vector<16x256xf32> -> vector<16x256xf32>
    %c0_3 = arith.constant 0 : index
    %c0_4 = arith.constant 0 : index
    %3 = vector.load %arg3[%c0_3, %c0_4] : memref<1x256xf32, #tpu.memory_space<vmem>>, vector<1x256xf32>
    %4 = vector.broadcast %3 : vector<1x256xf32> to vector<16x256xf32>
    %5 = arith.addf %2, %4 : vector<16x256xf32>
    %cst_5 = arith.constant 0.000000e+00 : f32
    %6 = vector.broadcast %cst_5 : f32 to vector<16x256xf32>
    %7 = arith.maximumf %5, %6 : vector<16x256xf32>
    %c0_6 = arith.constant 0 : index
    %c0_7 = arith.constant 0 : index
    %8 = vector.load %arg4[%c0_6, %c0_7] : memref<256x128xf32, #tpu.memory_space<vmem>>, vector<256x128xf32>
    %cst_8 = arith.constant dense<0.000000e+00> : vector<16x128xf32>
    %9 = tpu.matmul %7, %8, %cst_8 {dimension_numbers = #tpu.dot_dimension_numbers<[1], [0], [0], [1], [0, 0, 1, 1], [], []>} : vector<16x256xf32>, vector<256x128xf32>, vector<16x128xf32> -> vector<16x128xf32>
    %c0_9 = arith.constant 0 : index
    %c0_10 = arith.constant 0 : index
    %10 = vector.load %arg5[%c0_9, %c0_10] : memref<1x128xf32, #tpu.memory_space<vmem>>, vector<1x128xf32>
    %11 = vector.broadcast %10 : vector<1x128xf32> to vector<16x128xf32>
    %12 = arith.addf %9, %11 : vector<16x128xf32>
    %c0_11 = arith.constant 0 : index
    %c0_12 = arith.constant 0 : index
    %13 = vector.load %arg6[%c0_11, %c0_12] : memref<16x128xf32, #tpu.memory_space<vmem>>, vector<16x128xf32>
    tpu.vector_store %arg6[%c0_11, %c0_12], %12 {strides = array<i32>} : memref<16x128xf32, #tpu.memory_space<vmem>>, vector<16x128xf32>,
    return
  }
  func.func @transform_0(%arg0: i32) -> (i32, i32) {
    %c0_i32 = arith.constant 0 : i32
    %c0_i32_0 = arith.constant 0 : i32
    return %arg0, %c0_i32 : i32, i32
  }
  func.func @transform_1(%arg0: i32) -> (i32, i32) {
    %c0_i32 = arith.constant 0 : i32
    %c0_i32_0 = arith.constant 0 : i32
    %c0_i32_1 = arith.constant 0 : i32
    return %c0_i32, %c0_i32_0 : i32, i32
  }
  func.func @transform_2(%arg0: i32) -> (i32, i32) {
    %c0_i32 = arith.constant 0 : i32
    %c0_i32_0 = arith.constant 0 : i32
    %c0_i32_1 = arith.constant 0 : i32
    return %c0_i32, %c0_i32_0 : i32, i32
  }
  func.func @transform_3(%arg0: i32) -> (i32, i32) {
    %c0_i32 = arith.constant 0 : i32
    %c0_i32_0 = arith.constant 0 : i32
    %c0_i32_1 = arith.constant 0 : i32
    return %c0_i32, %c0_i32_0 : i32, i32
  }
  func.func @transform_4(%arg0: i32) -> (i32, i32) {
    %c0_i32 = arith.constant 0 : i32
    %c0_i32_0 = arith.constant 0 : i32
    %c0_i32_1 = arith.constant 0 : i32
    return %c0_i32, %c0_i32_0 : i32, i32
  }
  func.func @transform_5(%arg0: i32) -> (i32, i32) {
    %c0_i32 = arith.constant 0 : i32
    %c0_i32_0 = arith.constant 0 : i32
    return %arg0, %c0_i32 : i32, i32
  }
}

</mosaic_0001>

<llo_original>
// kernel: encoder_forward.1
$region0: #{encoder_forward.1}
  #allocation0 [shape = 'u32[]', space=smem, size = 0x4, offset = 0x4, fixed_abs, tag = 'smem constant byte address 0x4 - core index']
  #allocation1 [shape = 'u32[144,128]{1,0:T(1,128)}', space=vmem, size = 0x12000, scoped, tag = 'internal scratch']
  %s0 = inlined_call_operand.vmem [shape: f32[16,128], index: 0, kind: input, shape index: {}]
  %s1 = inlined_call_operand.hbm [shape: f32[128,256], index: 1, kind: input, shape index: {}]
  %s2 = inlined_call_operand.vmem [shape: f32[1,256], index: 2, kind: input, shape index: {}]
  %s3 = inlined_call_operand.hbm [shape: f32[256,128], index: 3, kind: input, shape index: {}]
  %s4 = inlined_call_operand.vmem [shape: f32[1,128], index: 4, kind: input, shape index: {}]
  %s5 = inlined_call_operand.vmem [shape: f32[16,128], index: 5, kind: output, shape index: {}]
  %s6 = sld [smem:[#allocation0]]
  $region38: #{encoder_forward.1} parent=0
    _
  %s8 = ssub.s32 1, %s6
  %s9 = scalar_select 0, %s8, %s6
  $region1: #{encoder_forward.1} parent=0
    #allocation2 [shape = 'u8[131072]{0}', space=vmem, size = 0x20000, scoped, tag = 'input window, operand 1, single buffered']
    #allocation3 [shape = 's32[1]{0}', space=sflag, size = 0x4, scoped, tag = 'scoped memory for encoder_forward.1']
    #allocation4 [shape = 'u8[131072]{0}', space=vmem, size = 0x20000, scoped, tag = 'input window, operand 3, single buffered']
    #allocation5 [shape = 's32[1]{0}', space=sflag, size = 0x4, scoped, tag = 'scoped memory for encoder_forward.1']
    %10 = vsyncpa [#allocation3], 0
    %11 = vsyncpa [#allocation5], 0
    // Predicated region
    $region2: #{encoder_forward.1} parent=1 // pred_check
      _
    $region3: #{encoder_forward.1} parent=1 // pred_check_branch
      %13 = sbr.rel (0) target = $region5
    $region4: #{encoder_forward.1} parent=1 // pred_region
      _
    $region5: #{encoder_forward.1} parent=1 // pred_fallthru
      _
    // Predicated region
    $region6: #{encoder_forward.1} parent=1 // pred_check
      _
    $region7: #{encoder_forward.1} parent=1 // pred_check_branch
      %15 = sbr.rel (0) target = $region9
    $region8: #{encoder_forward.1} parent=1 // pred_region
      %s17 = ssub.s32 4096, 4096
      %18 = vsyncadd [#allocation3], %s17
      %s19 = sshll.u32 [#allocation2], 4
      %s20 = int_to_ptr.vmem [resolvable:$true] %s19
      %25 = dma.hbm_to_vmem [thread:$0]  %s1, 4096, %s20, [#allocation3], 256, 256, 16
    $region9: #{encoder_forward.1} parent=1 // pred_fallthru
      _
    // Predicated region
    $region10: #{encoder_forward.1} parent=1 // pred_check
      _
    $region11: #{encoder_forward.1} parent=1 // pred_check_branch
      %27 = sbr.rel (0) target = $region13
    $region12: #{encoder_forward.1} parent=1 // pred_region
      _
    $region13: #{encoder_forward.1} parent=1 // pred_fallthru
      _
    // Predicated region
    $region14: #{encoder_forward.1} parent=1 // pred_check
      _
    $region15: #{encoder_forward.1} parent=1 // pred_check_branch
      %29 = sbr.rel (0) target = $region17
    $region16: #{encoder_forward.1} parent=1 // pred_region
      %s31 = ssub.s32 4096, 4096
      %32 = vsyncadd [#allocation5], %s31
      %s33 = sshll.u32 [#allocation4], 4
      %s34 = int_to_ptr.vmem [resolvable:$true] %s33
      %39 = dma.hbm_to_vmem [thread:$0]  %s3, 4096, %s34, [#allocation5], 128, 128, 8
    $region17: #{encoder_forward.1} parent=1 // pred_fallthru
      _
    // Predicated region
    $region18: #{encoder_forward.1} parent=1 // pred_check
      _
    $region19: #{encoder_forward.1} parent=1 // pred_check_branch
      %41 = sbr.rel (0) target = $region21
    $region20: #{encoder_forward.1} parent=1 // pred_region
      _
    $region21: #{encoder_forward.1} parent=1 // pred_fallthru
      _
    // Predicated region
    $region22: #{encoder_forward.1} parent=1 // pred_check
      _
    $region23: #{encoder_forward.1} parent=1 // pred_check_branch
      %43 = sbr.rel (0) target = $region25
    $region24: #{encoder_forward.1} parent=1 // pred_region
      %44 = dma.done [#allocation3], 4096
    $region25: #{encoder_forward.1} parent=1 // pred_fallthru
      _
    // Predicated region
    $region26: #{encoder_forward.1} parent=1 // pred_check
      _
    $region27: #{encoder_forward.1} parent=1 // pred_check_branch
      %46 = sbr.rel (0) target = $region29
    $region28: #{encoder_forward.1} parent=1 // pred_region
      %47 = dma.done [#allocation5], 4096
    $region29: #{encoder_forward.1} parent=1 // pred_fallthru
      _
    %v48 = vld [vmem:[%s0] sm:$0xff]
    %v49 = vld [vmem:[%s0 + $0x8] sm:$0xff]
    %v50 = vld [vmem:[#allocation2] sm:$0xff]
    %v51 = vld [vmem:[#allocation2 + $0x8] sm:$0xff]
    %v52 = vld [vmem:[#allocation2 + $0x10] sm:$0xff]
    %v53 = vld [vmem:[#allocation2 + $0x18] sm:$0xff]
    %v54 = vld [vmem:[#allocation2 + $0x20] sm:$0xff]
    %v55 = vld [vmem:[#allocation2 + $0x28] sm:$0xff]
    %v56 = vld [vmem:[#allocation2 + $0x30] sm:$0xff]
    %v57 = vld [vmem:[#allocation2 + $0x38] sm:$0xff]
    %v58 = vld [vmem:[#allocation2 + $0x40] sm:$0xff]
    %v59 = vld [vmem:[#allocation2 + $0x48] sm:$0xff]
    %v60 = vld [vmem:[#allocation2 + $0x50] sm:$0xff]
    %v61 = vld [vmem:[#allocation2 + $0x58] sm:$0xff]
    %v62 = vld [vmem:[#allocation2 + $0x60] sm:$0xff]
    %v63 = vld [vmem:[#allocation2 + $0x68] sm:$0xff]
    %v64 = vld [vmem:[#allocation2 + $0x70] sm:$0xff]
    %v65 = vld [vmem:[#allocation2 + $0x78] sm:$0xff]
    %v66 = vld [vmem:[#allocation2 + $0x80] sm:$0xff]
    %v67 = vld [vmem:[#allocation2 + $0x88] sm:$0xff]
    %v68 = vld [vmem:[#allocation2 + $0x90] sm:$0xff]
    %v69 = vld [vmem:[#allocation2 + $0x98] sm:$0xff]
    %v70 = vld [vmem:[#allocation2 + $0xa0] sm:$0xff]
    %v71 = vld [vmem:[#allocation2 + $0xa8] sm:$0xff]
    %v72 = vld [vmem:[#allocation2 + $0xb0] sm:$0xff]
    %v73 = vld [vmem:[#allocation2 + $0xb8] sm:$0xff]
    %v74 = vld [vmem:[#allocation2 + $0xc0] sm:$0xff]
    %v75 = vld [vmem:[#allocation2 + $0xc8] sm:$0xff]
    %v76 = vld [vmem:[#allocation2 + $0xd0] sm:$0xff]
    %v77 = vld [vmem:[#allocation2 + $0xd8] sm:$0xff]
    %v78 = vld [vmem:[#allocation2 + $0xe0] sm:$0xff]
    %v79 = vld [vmem:[#allocation2 + $0xe8] sm:$0xff]
    %v80 = vld [vmem:[#allocation2 + $0xf0] sm:$0xff]
    %v81 = vld [vmem:[#allocation2 + $0xf8] sm:$0xff]
    %v82 = vld [vmem:[%s2] sm:$0x3]
    %v84 = vlaneseq
    %v85 = vshrl.u32 %v84, 7
    %v86 = vsub.s32 0, %v85
    %v87 = vrot.slane %v82, %v86
    %v88 = vlaneseq
    %v89 = vshrl.u32 %v88, 7
    %v90 = vsub.s32 1, %v89
    %v91 = vrot.slane %v82, %v90
    %94 = vmatprep.subr.mxu0 %v81
    %95 = vmatpush1.msra.mxu0 %v80
    %96 = vmatprep.subr.mxu0 %v79
    %97 = vmatpush1.msra.mxu0 %v78
    %98 = vmatprep.subr.mxu0 %v77
    %99 = vmatpush1.msra.mxu0 %v76
    %100 = vmatprep.subr.mxu0 %v75
    %101 = vmatpush1.msra.mxu0 %v74
    %102 = vmatprep.subr.mxu0 %v73
    %103 = vmatpush1.msra.mxu0 %v72
    %104 = vmatprep.subr.mxu0 %v71
    %105 = vmatpush1.msra.mxu0 %v70
    %106 = vmatprep.subr.mxu0 %v69
    %107 = vmatpush1.msra.mxu0 %v68
    %108 = vmatprep.subr.mxu0 %v67
    %109 = vmatpush1.msra.mxu0 %v66
    %110 = vmatprep.subr.mxu0 %v65
    %111 = vmatpush1.msra.mxu0 %v64
    %112 = vmatprep.subr.mxu0 %v63
    %113 = vmatpush1.msra.mxu0 %v62
    %114 = vmatprep.subr.mxu0 %v61
    %115 = vmatpush1.msra.mxu0 %v60
    %116 = vmatprep.subr.mxu0 %v59
    %117 = vmatpush1.msra.mxu0 %v58
    %118 = vmatprep.subr.mxu0 %v57
    %119 = vmatpush1.msra.mxu0 %v56
    %120 = vmatprep.subr.mxu0 %v55
    %121 = vmatpush1.msra.mxu0 %v54
    %122 = vmatprep.subr.mxu0 %v53
    %123 = vmatpush1.msra.mxu0 %v52
    %124 = vmatprep.subr.mxu0 %v51
    %125 = vmatpush1.msra.mxu0 %v50
    %126 = vmatprep.subr.mxu0 0.0
    %127 = vmatpush2.msra.mxu0 0.0
    %128 = vmatprep.subr.mxu0 0.0
    %129 = vmatpush2.msra.mxu0 0.0
    %130 = vmatprep.subr.mxu0 0.0
    %131 = vmatpush2.msra.mxu0 0.0
    %132 = vmatprep.subr.mxu0 0.0
    %133 = vmatpush2.msra.mxu0 0.0
    %134 = vmatprep.subr.mxu0 0.0
    %135 = vmatpush2.msra.mxu0 0.0
    %136 = vmatprep.subr.mxu0 0.0
    %137 = vmatpush2.msra.mxu0 0.0
    %138 = vmatprep.subr.mxu0 0.0
    %139 = vmatpush2.msra.mxu0 0.0
    %140 = vmatprep.subr.mxu0 0.0
    %141 = vmatpush2.msra.mxu0 0.0
    %142 = vmatprep.subr.mxu0 0.0
    %143 = vmatpush2.msra.mxu0 0.0
    %144 = vmatprep.subr.mxu0 0.0
    %145 = vmatpush2.msra.mxu0 0.0
    %146 = vmatprep.subr.mxu0 0.0
    %147 = vmatpush2.msra.mxu0 0.0
    %148 = vmatprep.subr.mxu0 0.0
    %149 = vmatpush2.msra.mxu0 0.0
    %150 = vmatprep.subr.mxu0 0.0
    %151 = vmatpush2.msra.mxu0 0.0
    %152 = vmatprep.subr.mxu0 0.0
    %153 = vmatpush2.msra.mxu0 0.0
    %154 = vmatprep.subr.mxu0 0.0
    %155 = vmatpush2.msra.mxu0 0.0
    %156 = vmatprep.subr.mxu0 0.0
    %157 = vmatpush2.msra.mxu0 0.0
    %158 = vmatprep.mubr.f32.mxu0 0.0
    %159 = vmatmul.mubr.f32.gmra.mxu0 %v48
    %v160 = vpop.f32.mrf.mxu0
    %v161 = vadd.f32 %v87, %v160
    %v162 = vpop.f32.mrf.mxu0
    %v163 = vadd.f32 %v91, %v162
    %164 = vmatprep.mubr.f32.mxu0 0.0
    %165 = vmatmul.mubr.f32.gmra.mxu0 %v49
    %v166 = vpop.f32.mrf.mxu0
    %v167 = vadd.f32 %v87, %v166
    %v168 = vpop.f32.mrf.mxu0
    %v169 = vadd.f32 %v91, %v168
    %170 = vdwg.mxu0
    %v171 = vmax.f32 %v161, 0.0
    %v172 = vmax.f32 %v163, 0.0
    %v173 = vmax.f32 %v167, 0.0
    %v174 = vmax.f32 %v169, 0.0
    %v175 = vld [vmem:[#allocation4] sm:$0xff]
    %v176 = vld [vmem:[#allocation4 + $0x8] sm:$0xff]
    %v177 = vld [vmem:[#allocation4 + $0x10] sm:$0xff]
    %v178 = vld [vmem:[#allocation4 + $0x18] sm:$0xff]
    %v179 = vld [vmem:[#allocation4 + $0x20] sm:$0xff]
    %v180 = vld [vmem:[#allocation4 + $0x28] sm:$0xff]
    %v181 = vld [vmem:[#allocation4 + $0x30] sm:$0xff]
    %v182 = vld [vmem:[#allocation4 + $0x38] sm:$0xff]
    %v183 = vld [vmem:[#allocation4 + $0x40] sm:$0xff]
    %v184 = vld [vmem:[#allocation4 + $0x48] sm:$0xff]
    %v185 = vld [vmem:[#allocation4 + $0x50] sm:$0xff]
    %v186 = vld [vmem:[#allocation4 + $0x58] sm:$0xff]
    %v187 = vld [vmem:[#allocation4 + $0x60] sm:$0xff]
    %v188 = vld [vmem:[#allocation4 + $0x68] sm:$0xff]
    %v189 = vld [vmem:[#allocation4 + $0x70] sm:$0xff]
    %v190 = vld [vmem:[#allocation4 + $0x78] sm:$0xff]
    %v191 = vld [vmem:[#allocation4 + $0x80] sm:$0xff]
    %v192 = vld [vmem:[#allocation4 + $0x88] sm:$0xff]
    %v193 = vld [vmem:[#allocation4 + $0x90] sm:$0xff]
    %v194 = vld [vmem:[#allocation4 + $0x98] sm:$0xff]
    %v195 = vld [vmem:[#allocation4 + $0xa0] sm:$0xff]
    %v196 = vld [vmem:[#allocation4 + $0xa8] sm:$0xff]
    %v197 = vld [vmem:[#allocation4 + $0xb0] sm:$0xff]
    %v198 = vld [vmem:[#allocation4 + $0xb8] sm:$0xff]
    %v199 = vld [vmem:[#allocation4 + $0xc0] sm:$0xff]
    %v200 = vld [vmem:[#allocation4 + $0xc8] sm:$0xff]
    %v201 = vld [vmem:[#allocation4 + $0xd0] sm:$0xff]
    %v202 = vld [vmem:[#allocation4 + $0xd8] sm:$0xff]
    %v203 = vld [vmem:[#allocation4 + $0xe0] sm:$0xff]
    %v204 = vld [vmem:[#allocation4 + $0xe8] sm:$0xff]
    %v205 = vld [vmem:[#allocation4 + $0xf0] sm:$0xff]
    %v206 = vld [vmem:[#allocation4 + $0xf8] sm:$0xff]
    %v207 = vld [vmem:[%s4] sm:$0x1]
    %v209 = vlaneseq
    %v210 = vshrl.u32 %v209, 7
    %v211 = vsub.s32 0, %v210
    %v212 = vrot.slane %v207, %v211
    %214 = vmatprep.subr.mxu0 0.0
    %215 = vmatpush1.msra.mxu0 %v190
    %216 = vmatprep.subr.mxu0 0.0
    %217 = vmatpush1.msra.mxu0 %v189
    %218 = vmatprep.subr.mxu0 0.0
    %219 = vmatpush1.msra.mxu0 %v188
    %220 = vmatprep.subr.mxu0 0.0
    %221 = vmatpush1.msra.mxu0 %v187
    %222 = vmatprep.subr.mxu0 0.0
    %223 = vmatpush1.msra.mxu0 %v186
    %224 = vmatprep.subr.mxu0 0.0
    %225 = vmatpush1.msra.mxu0 %v185
    %226 = vmatprep.subr.mxu0 0.0
    %227 = vmatpush1.msra.mxu0 %v184
    %228 = vmatprep.subr.mxu0 0.0
    %229 = vmatpush1.msra.mxu0 %v183
    %230 = vmatprep.subr.mxu0 0.0
    %231 = vmatpush1.msra.mxu0 %v182
    %232 = vmatprep.subr.mxu0 0.0
    %233 = vmatpush1.msra.mxu0 %v181
    %234 = vmatprep.subr.mxu0 0.0
    %235 = vmatpush1.msra.mxu0 %v180
    %236 = vmatprep.subr.mxu0 0.0
    %237 = vmatpush1.msra.mxu0 %v179
    %238 = vmatprep.subr.mxu0 0.0
    %239 = vmatpush1.msra.mxu0 %v178
    %240 = vmatprep.subr.mxu0 0.0
    %241 = vmatpush1.msra.mxu0 %v177
    %242 = vmatprep.subr.mxu0 0.0
    %243 = vmatpush1.msra.mxu0 %v176
    %244 = vmatprep.subr.mxu0 0.0
    %245 = vmatpush1.msra.mxu0 %v175
    %246 = vmatprep.subr.mxu0 0.0
    %247 = vmatpush2.msra.mxu0 %v206
    %248 = vmatprep.subr.mxu0 0.0
    %249 = vmatpush2.msra.mxu0 %v205
    %250 = vmatprep.subr.mxu0 0.0
    %251 = vmatpush2.msra.mxu0 %v204
    %252 = vmatprep.subr.mxu0 0.0
    %253 = vmatpush2.msra.mxu0 %v203
    %254 = vmatprep.subr.mxu0 0.0
    %255 = vmatpush2.msra.mxu0 %v202
    %256 = vmatprep.subr.mxu0 0.0
    %257 = vmatpush2.msra.mxu0 %v201
    %258 = vmatprep.subr.mxu0 0.0
    %259 = vmatpush2.msra.mxu0 %v200
    %260 = vmatprep.subr.mxu0 0.0
    %261 = vmatpush2.msra.mxu0 %v199
    %262 = vmatprep.subr.mxu0 0.0
    %263 = vmatpush2.msra.mxu0 %v198
    %264 = vmatprep.subr.mxu0 0.0
    %265 = vmatpush2.msra.mxu0 %v197
    %266 = vmatprep.subr.mxu0 0.0
    %267 = vmatpush2.msra.mxu0 %v196
    %268 = vmatprep.subr.mxu0 0.0
    %269 = vmatpush2.msra.mxu0 %v195
    %270 = vmatprep.subr.mxu0 0.0
    %271 = vmatpush2.msra.mxu0 %v194
    %272 = vmatprep.subr.mxu0 0.0
    %273 = vmatpush2.msra.mxu0 %v193
    %274 = vmatprep.subr.mxu0 0.0
    %275 = vmatpush2.msra.mxu0 %v192
    %276 = vmatprep.subr.mxu0 0.0
    %277 = vmatpush2.msra.mxu0 %v191
    %278 = vmatprep.mubr.f32.mxu0 %v172
    %279 = vmatmul.mubr.f32.gmra.mxu0 %v171
    %v280 = vpop.f32.mrf.mxu0
    %v281 = vadd.f32 %v212, %v280
    %v282 = vpop.f32.mrf.mxu0
    %283 = vmatprep.mubr.f32.mxu0 %v174
    %284 = vmatmul.mubr.f32.gmra.mxu0 %v173
    %v285 = vpop.f32.mrf.mxu0
    %v286 = vadd.f32 %v212, %v285
    %v287 = vpop.f32.mrf.mxu0
    %288 = vdwg.mxu0
    %289 = vst [vmem:[%s5] sm:$0xff] %v281
    %290 = vst [vmem:[%s5 + $0x8] sm:$0xff] %v286
    // Predicated region
    $region30: #{encoder_forward.1} parent=1 // pred_check
      _
    $region31: #{encoder_forward.1} parent=1 // pred_check_branch
      %292 = sbr.rel (0) target = $region33
    $region32: #{encoder_forward.1} parent=1 // pred_region
      _
    $region33: #{encoder_forward.1} parent=1 // pred_fallthru
      _
    // Predicated region
    $region34: #{encoder_forward.1} parent=1 // pred_check
      _
    $region35: #{encoder_forward.1} parent=1 // pred_check_branch
      %294 = sbr.rel (0) target = $region37
    $region36: #{encoder_forward.1} parent=1 // pred_region
      _
    $region37: #{encoder_forward.1} parent=1 // pred_fallthru
      _
    %295 = vsyncpa [#allocation3], 1
    %296 = vsyncpa [#allocation5], 1

</llo_original>
